<compile_context>
chip_gen: v7x
topology: tpu7x:2x2x1
jax: 0.10.0
libtpu: 0.0.40
codegen_flags: <defaults>
</compile_context>

<pallas_src>
import functools

import jax
import jax.numpy as jnp
from jax.experimental import pallas as pl
from jax.experimental.pallas import tpu as pltpu


_VMEM_LIMIT = 32 * 1024 * 1024   # safe on every generation (v7x physical VMEM is 64 MiB)


# ----------------------------- Pallas kernels ------------------------------ #

def trans_kernel(x_ref, w_ref, b_ref, o_ref):
    """Pointwise Conv1D(Cin->Cout, k=1) + folded BN + ReLU, channel-first.

    x_ref: (1, Cin, TN) bf16   w_ref: (Cout, Cin) bf16   b_ref: (Cout, 1) f32
    o_ref: (1, Cout, TN) bf16
    Cin is tiny (3), so the contraction runs on the VPU as Cin broadcast-FMAs instead of
    wasting an MXU pass on a 3-deep contraction.
    """
    x = x_ref[0].astype(jnp.float32)                    # (Cin, TN)
    w = w_ref[...].astype(jnp.float32)                  # (Cout, Cin)
    y = b_ref[...]                                      # (Cout, 1) -> broadcasts over lanes
    for c in range(w.shape[1]):                         # static unroll (Cin = 3)
        y = y + w[:, c:c + 1] * x[c:c + 1, :]
    o_ref[0] = jnp.maximum(y, 0.0).astype(o_ref.dtype)


def graphconv_kernel(edge_ref, x_ref,
                     w1_ref, b1_ref, wh1_ref, wh2_ref, wh3_ref, wx_ref, bx_ref,
                     o_ref, *, knn, growth):
    """Dense-growth MLP (fused weight splits) + max aggregation over K neighbors.

    edge_ref : (1, K, Ce, TN) bf16   per-neighbor edge features, channel-first
    x_ref    : (1, C, TN)     bf16   per-point features (never duplicated over K)
    o_ref    : (1, D, TN)     f32    channel-first, lane-dense store
    weights  : pre-transposed (out, in) bf16; biases are f32 column vectors
    """
    g = growth
    dot = lambda wr, a: jnp.dot(wr[...], a, preferred_element_type=jnp.float32)

    x = x_ref[0]                                        # (C, TN) bf16
    # Per-point contributions of x to the mid/last/out layers (+ their biases), computed once
    # per tile and reused for every one of the K neighbors.
    xc = dot(wx_ref, x) + bx_ref[...]                   # (2g + D, TN) f32
    xc2, xc3, xc4 = xc[:g], xc[g:2 * g], xc[2 * g:]

    b1 = b1_ref[...]                                    # (g, 1) f32
    edge = edge_ref[0]                                  # (K, Ce, TN) bf16

    acc = None
    for k in range(knn):                                # static unroll over neighbors
        e_k = edge[k]                                   # (Ce, TN) bf16
        # layer_first
        h1 = jnp.maximum(dot(w1_ref, e_k) + b1, 0.0)                         # (g, TN) f32
        a1 = dot(wh1_ref, h1.astype(jnp.bfloat16))                           # h1 -> [mid|last|out]
        # layers_mid[0]  (input channels [h1 | x])
        h2 = jnp.maximum(a1[:g] + xc2, 0.0)
        a2 = dot(wh2_ref, h2.astype(jnp.bfloat16))                           # h2 -> [last|out]
        # layer_last     (input channels [h2 | h1 | x])
        h3 = jnp.maximum(a2[:g] + a1[g:2 * g] + xc3, 0.0)
        # layer_out      (input channels [h3 | h2 | h1 | x], no BN / no ReLU)
        yo = dot(wh3_ref, h3.astype(jnp.bfloat16)) + a2[g:] + a1[2 * g:] + xc4   # (D, TN)
        acc = yo if acc is None else jnp.maximum(acc, yo)                    # running K-max
    o_ref[0] = acc.astype(o_ref.dtype)


# ------------------------------ JAX glue ----------------------------------- #

def fold_bn(w, b, gamma, beta, mean, var, eps=1e-5):
    """Fold eval-mode BatchNorm1d into a (Cin, Cout) weight + (Cout,) bias."""
    scale = gamma / jnp.sqrt(var + eps)
    return w * scale[None, :], (b - mean) * scale + beta


def init_conv1d(key, cin, cout, with_bn=True):
    """Deterministic synthetic Conv1D(+BN) parameters, BN pre-folded."""
    kw, kb, kg, kbe, km, kv = jax.random.split(key, 6)
    w = jax.random.normal(kw, (cin, cout), jnp.float32) / jnp.sqrt(float(cin))
    b = 0.05 * jax.random.normal(kb, (cout,), jnp.float32)
    if with_bn:
        gamma = 1.0 + 0.1 * jax.random.normal(kg, (cout,), jnp.float32)
        beta = 0.05 * jax.random.normal(kbe, (cout,), jnp.float32)
        mean = 0.01 * jax.random.normal(km, (cout,), jnp.float32)
        var = 1.0 + 0.1 * jax.random.uniform(kv, (cout,), jnp.float32)
        w, b = fold_bn(w, b, gamma, beta, mean, var)
    return w, b.reshape(1, cout)


def _maybe_pad_points(n):
    """Pad N to a multiple of 128 when a whole-N tile would be too large (v7x 64 MiB VMEM)."""
    if n % 128 == 0 or n <= 256:
        return n
    return ((n + 127) // 128) * 128


def _pick_point_tile(n, batch):
    """Lane-dense point tile (multiple of 128) where possible, capped at 512 and sized so the
    grid keeps >= ~8 steps to feed both v7x TensorCores with pipelined iterations."""
    if n % 128 != 0:
        return n           # small-N path (n <= 256 guaranteed by _maybe_pad_points)
    tn = 128
    while tn < 512 and n % (tn * 2) == 0 and (n // (tn * 2)) * batch >= 8:
        tn *= 2
    return tn


def run_trans(x_cf, w, b, tn):
    """(B, Cin, N) f32 -> (B, Cout, N) bf16 via a tiled channel-first Pallas kernel."""
    B, Cin, N = x_cf.shape
    Cout = w.shape[1]
    w_t = w.T.astype(jnp.bfloat16)                       # (Cout, Cin)
    b_c = b.reshape(Cout, 1)                             # f32 column
    x_bf = x_cf.astype(jnp.bfloat16)

    cost = pl.CostEstimate(flops=2 * B * N * Cin * Cout, transcendentals=0,
                           bytes_accessed=B * N * (Cin + Cout) * 2 + Cout * (Cin + 1) * 4)

    return pl.pallas_call(
        trans_kernel,
        out_shape=jax.ShapeDtypeStruct((B, Cout, N), jnp.bfloat16),
        grid=(B, N // tn),
        in_specs=[
            pl.BlockSpec((1, Cin, tn), lambda b_, t: (b_, 0, t)),
            pl.BlockSpec(w_t.shape, lambda b_, t: (0, 0)),
            pl.BlockSpec(b_c.shape, lambda b_, t: (0, 0)),
        ],
        out_specs=pl.BlockSpec((1, Cout, tn), lambda b_, t: (b_, 0, t)),
        compiler_params=pltpu.CompilerParams(
            dimension_semantics=("parallel", "parallel"),
            vmem_limit_bytes=_VMEM_LIMIT),
        cost_estimate=cost,
    )(x_bf, w_t, b_c)


def edge_features_cf(h_cf, pos_cf, knn_idx):
    """relative_feat_only edge features, channel-first per neighbor (XLA glue gather).

    h_cf: (B, C, N) bf16   pos_cf: (B, 3, N) bf16   knn_idx: (B, N, K)
    -> (B, K, 3 + C, N) bf16 : edge[b, k, :, n] = [pos[knn] - pos, h[knn] - h]
    """
    idx_kn = jnp.transpose(knn_idx, (0, 2, 1))                  # (B, K, N)
    gat = jax.vmap(lambda f, i: f[:, i])                        # (C,N),(K,N) -> (C,K,N)
    pos_d = gat(pos_cf, idx_kn) - pos_cf[:, :, None, :]         # (B, 3, K, N)
    feat_d = gat(h_cf, idx_kn) - h_cf[:, :, None, :]            # (B, C, K, N)
    edge = jnp.concatenate([pos_d, feat_d], axis=1)             # (B, 3+C, K, N)
    return jnp.transpose(edge, (0, 2, 1, 3))                    # (B, K, 3+C, N)


def run_graphconv(edge_kf, h_cf, params, K, tn):
    """edge_kf: (B, K, Ce, N) bf16, h_cf: (B, C, N) bf16 -> (B, D, N) f32."""
    B, _, Ce, N = edge_kf.shape
    C = h_cf.shape[1]
    w1, b1 = params["first"]
    w2, b2 = params["mid"]
    w3, b3 = params["last"]
    w4, b4 = params["out"]
    g = w1.shape[1]
    D = w4.shape[1]
    bf = jnp.bfloat16

    # Dense-growth input channel order is [h_i | ... | h1 | x]; split per input block, then
    # re-fuse along the OUTPUT dimension so each activation feeds one wide bf16 matmul.
    w2h1, w2x = w2[:g], w2[g:]
    w3h2, w3h1, w3x = w3[:g], w3[g:2 * g], w3[2 * g:]
    w4h3, w4h2, w4h1, w4x = w4[:g], w4[g:2 * g], w4[2 * g:3 * g], w4[3 * g:]

    w1_t = w1.T.astype(bf)                                               # (g, Ce)
    b1_c = b1.reshape(g, 1)                                              # f32
    wh1_t = jnp.concatenate([w2h1, w3h1, w4h1], axis=1).T.astype(bf)     # (2g+D, g)
    wh2_t = jnp.concatenate([w3h2, w4h2], axis=1).T.astype(bf)           # (g+D, g)
    wh3_t = w4h3.T.astype(bf)                                            # (D, g)
    wx_t = jnp.concatenate([w2x, w3x, w4x], axis=1).T.astype(bf)         # (2g+D, C)
    bx_c = jnp.concatenate([b2, b3, b4], axis=1).reshape(2 * g + D, 1)   # f32

    nt = N // tn
    kernel = functools.partial(graphconv_kernel, knn=K, growth=g)
    wspec = lambda a: pl.BlockSpec(a.shape, lambda b_, t: (0, 0))

    flops = 2 * B * N * K * g * (Ce + (2 * g + D) + (g + D) + D) + 2 * B * N * (2 * g + D) * C
    bytes_accessed = (edge_kf.size * 2 + h_cf.size * 2 + B * D * N * 4
                      + 2 * (w1_t.size + wh1_t.size + wh2_t.size + wh3_t.size + wx_t.size)
                      + 4 * (b1_c.size + bx_c.size))
    cost = pl.CostEstimate(flops=int(flops), transcendentals=0, bytes_accessed=int(bytes_accessed))

    return pl.pallas_call(
        kernel,
        out_shape=jax.ShapeDtypeStruct((B, D, N), jnp.float32),
        grid=(B, nt),
        in_specs=[
            pl.BlockSpec((1, K, Ce, tn), lambda b_, t: (b_, 0, 0, t)),
            pl.BlockSpec((1, C, tn), lambda b_, t: (b_, 0, t)),
            wspec(w1_t), wspec(b1_c), wspec(wh1_t), wspec(wh2_t), wspec(wh3_t),
            wspec(wx_t), wspec(bx_c),
        ],
        out_specs=pl.BlockSpec((1, D, tn), lambda b_, t: (b_, 0, t)),
        compiler_params=pltpu.CompilerParams(
            dimension_semantics=("parallel", "parallel"),
            vmem_limit_bytes=_VMEM_LIMIT),
        cost_estimate=cost,
    )(edge_kf, h_cf, w1_t, b1_c, wh1_t, wh2_t, wh3_t, wx_t, bx_c)


def encode_net_forward(x, pos, knn_idx, params, K):
    """EncodeNet.forward (num_convs=1): x (B,3,N), pos (B,3,N), knn_idx (B,N,K) -> (B,60,N)."""
    B, _, N = x.shape
    Np = _maybe_pad_points(N)
    if Np != N:
        padw = ((0, 0), (0, 0), (0, Np - N))
        x = jnp.pad(x, padw)
        pos = jnp.pad(pos, padw)
        knn_idx = jnp.pad(knn_idx, ((0, 0), (0, Np - N), (0, 0)))   # padded rows index 0 (valid)
    tn = _pick_point_tile(Np, B)

    # trans[0]: Conv1D(3 -> conv_channels) + BN + ReLU, bf16 channel-first output.
    h_cf = run_trans(x, *params["trans"], tn)                       # (B, C, Np) bf16

    # edge-feature gather (XLA glue); one channel-first slab per neighbor.
    edge_kf = edge_features_cf(h_cf, pos.astype(jnp.bfloat16), knn_idx)   # (B, K, Ce, Np)

    out = run_graphconv(edge_kf, h_cf, params, K, tn)               # (B, D, Np) f32
    return out[:, :, :N] if Np != N else out


# ------------------------------ references --------------------------------- #

def reference_forward(x, pos, knn_idx, params, K):
    """Pure-JAX f32 reference with the original concatenated dense-growth structure."""
    B, _, N = x.shape
    x_t = jnp.transpose(x, (0, 2, 1))
    pos_t = jnp.transpose(pos, (0, 2, 1))
    h = jax.nn.relu(x_t @ params["trans"][0] + params["trans"][1])          # (B, N, C)
    gather = jax.vmap(lambda f, i: f[i])
    edge = jnp.concatenate([gather(pos_t, knn_idx) - pos_t[:, :, None, :],
                            gather(h, knn_idx) - h[:, :, None, :]], axis=-1)
    conv = lambda y, wb: jax.nn.relu(y @ wb[0] + wb[1])
    y = jnp.concatenate([conv(edge, params["first"]),
                         jnp.broadcast_to(h[:, :, None, :], (B, N, K, h.shape[-1]))], -1)
    y = jnp.concatenate([conv(y, params["mid"]), y], -1)
    y = jnp.concatenate([conv(y, params["last"]), y], -1)
    yo = y @ params["out"][0] + params["out"][1]
    return jnp.transpose(jnp.max(yo, axis=2), (0, 2, 1))                    # (B, D, N)


def reference_forward_bf16(x, pos, knn_idx, params, K):
    """Pure-JAX reference mirroring the kernel's bf16 casts / weight splits (f32 accumulation)."""
    bf = jnp.bfloat16
    dot = lambda a, w: jnp.dot(a.astype(bf), w.astype(bf), preferred_element_type=jnp.float32)

    B, _, N = x.shape
    x_t = jnp.transpose(x, (0, 2, 1))
    pos_t = jnp.transpose(pos, (0, 2, 1)).astype(bf)
    wt, bt = params["trans"]
    h = jax.nn.relu(dot(x_t, wt) + bt).astype(bf)                           # (B, N, C)

    gather = jax.vmap(lambda f, i: f[i])
    edge = jnp.concatenate([gather(pos_t, knn_idx) - pos_t[:, :, None, :],
                            gather(h, knn_idx) - h[:, :, None, :]], axis=-1)

    w1, b1 = params["first"]; w2, b2 = params["mid"]
    w3, b3 = params["last"]; w4, b4 = params["out"]
    g = w1.shape[1]
    w2h1, w2x = w2[:g], w2[g:]
    w3h2, w3h1, w3x = w3[:g], w3[g:2 * g], w3[2 * g:]
    w4h3, w4h2, w4h1, w4x = w4[:g], w4[g:2 * g], w4[2 * g:3 * g], w4[3 * g:]

    h1 = jax.nn.relu(dot(edge, w1) + b1).astype(bf)                         # (B, N, K, g)
    xc2 = dot(h, w2x) + b2
    h2 = jax.nn.relu(dot(h1, w2h1) + xc2[:, :, None, :]).astype(bf)
    xc3 = dot(h, w3x) + b3
    h3 = jax.nn.relu(dot(h2, w3h2) + dot(h1, w3h1) + xc3[:, :, None, :]).astype(bf)
    xc4 = dot(h, w4x) + b4
    yo = dot(h3, w4h3) + dot(h2, w4h2) + dot(h1, w4h1) + xc4[:, :, None, :]
    return jnp.transpose(jnp.max(yo, axis=2), (0, 2, 1))                    # (B, D, N)


# -------------------------------- main -------------------------------------- #

if __name__ == "__main__":
    B, N, K = 2, 16, 8
    in_channels, conv_channels, growth_rate, num_fc_layers = 3, 24, 12, 3
    D = conv_channels + num_fc_layers * growth_rate                         # 60

    key = jax.random.PRNGKey(0)
    kx, kp, ki, k0, k1, k2, k3, k4 = jax.random.split(key, 8)

    x = jax.random.normal(kx, (B, in_channels, N), jnp.float32)
    pos = jax.random.normal(kp, (B, 3, N), jnp.float32)
    knn_idx = jax.random.randint(ki, (B, N, K), 0, N, jnp.int32)

    params = {
        "trans": init_conv1d(k0, in_channels, conv_channels, with_bn=True),
        "first": init_conv1d(k1, conv_channels + 3, growth_rate, with_bn=True),  # relative_feat_only
        "mid":   init_conv1d(k2, conv_channels + growth_rate, growth_rate, with_bn=True),
        "last":  init_conv1d(k3, conv_channels + 2 * growth_rate, growth_rate, with_bn=True),
        "out":   init_conv1d(k4, D, D, with_bn=False),                           # no BN, no ReLU
    }

    out = jax.block_until_ready(encode_net_forward(x, pos, knn_idx, params, K))
    assert out.shape == (B, D, N), out.shape

    # Structural check: reference with the same bf16 quantization / weight splits as the kernel.
    ref_q = jax.block_until_ready(reference_forward_bf16(x, pos, knn_idx, params, K))
    assert jnp.allclose(out, ref_q, atol=2e-2, rtol=2e-2), float(jnp.max(jnp.abs(out - ref_q)))

    # Fidelity check vs. the full-f32 concatenation-based reference (difference = bf16 only).
    ref = jax.block_until_ready(reference_forward(x, pos, knn_idx, params, K))
    assert jnp.allclose(out, ref, atol=3e-1, rtol=3e-1), float(jnp.max(jnp.abs(out - ref)))

    print("KERNEL_OK")
</pallas_src>

<mosaic_0001>
module attributes {stable_mosaic.version = 11 : i64} {
  func.func @trans_kernel(%arg0: i32, %arg1: i32, %arg2: memref<1x3x16xbf16, #tpu.memory_space<vmem>>, %arg3: memref<24x3xbf16, #tpu.memory_space<vmem>>, %arg4: memref<24x1xf32, #tpu.memory_space<vmem>>, %arg5: memref<1x24x16xbf16, #tpu.memory_space<vmem>>) attributes {dimension_semantics = [#tpu.dimension_semantics<parallel>, #tpu.dimension_semantics<parallel>], iteration_bounds = array<i64: 2, 1>, scalar_prefetch = 0 : i64, scratch_operands = 0 : i64, tpu.core_type = #tpu.core_type<tc>, window_params = [{transform_indices = @transform_0, window_bounds = array<i64: 1, 3, 16>}, {pipeline_mode = #tpu.pipeline_mode<synchronous>, transform_indices = @transform_1, window_bounds = array<i64: 24, 3>}, {pipeline_mode = #tpu.pipeline_mode<synchronous>, transform_indices = @transform_2, window_bounds = array<i64: 24, 1>}, {transform_indices = @transform_3, window_bounds = array<i64: 1, 24, 16>}]} {
    %c0 = arith.constant 0 : index
    %c0_0 = arith.constant 0 : index
    %c0_1 = arith.constant 0 : index
    %0 = vector.load %arg2[%c0, %c0_0, %c0_1] : memref<1x3x16xbf16, #tpu.memory_space<vmem>>, vector<1x3x16xbf16>
    %1 = vector.shape_cast %0 : vector<1x3x16xbf16> to vector<3x16xbf16>
    %2 = arith.extf %1 : vector<3x16xbf16> to vector<3x16xf32>
    %c0_2 = arith.constant 0 : index
    %c0_3 = arith.constant 0 : index
    %3 = vector.load %arg3[%c0_2, %c0_3] : memref<24x3xbf16, #tpu.memory_space<vmem>>, vector<24x3xbf16>
    %4 = arith.extf %3 : vector<24x3xbf16> to vector<24x3xf32>
    %c0_4 = arith.constant 0 : index
    %c0_5 = arith.constant 0 : index
    %5 = vector.load %arg4[%c0_4, %c0_5] : memref<24x1xf32, #tpu.memory_space<vmem>>, vector<24x1xf32>
    %6 = vector.extract_strided_slice %4 {offsets = [0, 0], sizes = [24, 1], strides = [1, 1]} : vector<24x3xf32> to vector<24x1xf32>
    %7 = vector.extract_strided_slice %2 {offsets = [0, 0], sizes = [1, 16], strides = [1, 1]} : vector<3x16xf32> to vector<1x16xf32>
    %8 = vector.broadcast %6 : vector<24x1xf32> to vector<24x16xf32>
    %9 = vector.broadcast %7 : vector<1x16xf32> to vector<24x16xf32>
    %10 = arith.mulf %8, %9 : vector<24x16xf32>
    %11 = vector.broadcast %5 : vector<24x1xf32> to vector<24x16xf32>
    %12 = arith.addf %11, %10 : vector<24x16xf32>
    %13 = vector.extract_strided_slice %4 {offsets = [0, 1], sizes = [24, 1], strides = [1, 1]} : vector<24x3xf32> to vector<24x1xf32>
    %14 = vector.extract_strided_slice %2 {offsets = [1, 0], sizes = [1, 16], strides = [1, 1]} : vector<3x16xf32> to vector<1x16xf32>
    %15 = vector.broadcast %13 : vector<24x1xf32> to vector<24x16xf32>
    %16 = vector.broadcast %14 : vector<1x16xf32> to vector<24x16xf32>
    %17 = arith.mulf %15, %16 : vector<24x16xf32>
    %18 = arith.addf %12, %17 : vector<24x16xf32>
    %19 = vector.extract_strided_slice %4 {offsets = [0, 2], sizes = [24, 1], strides = [1, 1]} : vector<24x3xf32> to vector<24x1xf32>
    %20 = vector.extract_strided_slice %2 {offsets = [2, 0], sizes = [1, 16], strides = [1, 1]} : vector<3x16xf32> to vector<1x16xf32>
    %21 = vector.broadcast %19 : vector<24x1xf32> to vector<24x16xf32>
    %22 = vector.broadcast %20 : vector<1x16xf32> to vector<24x16xf32>
    %23 = arith.mulf %21, %22 : vector<24x16xf32>
    %24 = arith.addf %18, %23 : vector<24x16xf32>
    %cst = arith.constant 0.000000e+00 : f32
    %25 = vector.broadcast %cst : f32 to vector<24x16xf32>
    %26 = arith.maximumf %24, %25 : vector<24x16xf32>
    %27 = arith.truncf %26 : vector<24x16xf32> to vector<24x16xbf16>
    %c0_6 = arith.constant 0 : index
    %c0_7 = arith.constant 0 : index
    %c0_8 = arith.constant 0 : index
    %28 = vector.load %arg5[%c0_6, %c0_7, %c0_8] : memref<1x24x16xbf16, #tpu.memory_space<vmem>>, vector<1x24x16xbf16>
    %29 = vector.shape_cast %28 : vector<1x24x16xbf16> to vector<24x16xbf16>
    %30 = vector.shape_cast %27 : vector<24x16xbf16> to vector<1x24x16xbf16>
    tpu.vector_store %arg5[%c0_6, %c0_7, %c0_8], %30 {strides = array<i32>} : memref<1x24x16xbf16, #tpu.memory_space<vmem>>, vector<1x24x16xbf16>,
    return
  }
  func.func @transform_0(%arg0: i32, %arg1: i32) -> (i32, i32, i32) {
    %c0_i32 = arith.constant 0 : i32
    %c0_i32_0 = arith.constant 0 : i32
    return %arg0, %c0_i32, %arg1 : i32, i32, i32
  }
  func.func @transform_1(%arg0: i32, %arg1: i32) -> (i32, i32) {
    %c0_i32 = arith.constant 0 : i32
    %c0_i32_0 = arith.constant 0 : i32
    %c0_i32_1 = arith.constant 0 : i32
    return %c0_i32, %c0_i32_0 : i32, i32
  }
  func.func @transform_2(%arg0: i32, %arg1: i32) -> (i32, i32) {
    %c0_i32 = arith.constant 0 : i32
    %c0_i32_0 = arith.constant 0 : i32
    %c0_i32_1 = arith.constant 0 : i32
    return %c0_i32, %c0_i32_0 : i32, i32
  }
  func.func @transform_3(%arg0: i32, %arg1: i32) -> (i32, i32, i32) {
    %c0_i32 = arith.constant 0 : i32
    %c0_i32_0 = arith.constant 0 : i32
    return %arg0, %c0_i32, %arg1 : i32, i32, i32
  }
}

</mosaic_0001>

<llo_original>
// kernel: tpu_custom_call.1
$region0: #{tpu_custom_call.1}
  #allocation0 [shape = 'u32[]', space=smem, size = 0x4, offset = 0x4, fixed_abs, tag = 'smem constant byte address 0x4 - core index']
  #allocation1 [shape = 'u32[144,128]{1,0:T(1,128)}', space=vmem, size = 0x12000, scoped, tag = 'internal scratch']
  %s0 = inlined_call_operand.vmem [shape: bf16[2,3,16], index: 0, kind: input, shape index: {}]
  %s1 = inlined_call_operand.vmem [shape: bf16[24,3], index: 1, kind: input, shape index: {}]
  %s2 = inlined_call_operand.vmem [shape: f32[24,1], index: 2, kind: input, shape index: {}]
  %s3 = inlined_call_operand.vmem [shape: bf16[2,24,16], index: 3, kind: output, shape index: {}]
  %s4 = sld [smem:[#allocation0]]
  $region45: #{tpu_custom_call.1} parent=0
    _
  %s6 = ssub.s32 1, %s4
  %s7 = scalar_select 0, %s6, %s4
  loop: start=0, step=1, limit=4
  $region2: #{tpu_custom_call.1} parent=0 // loop_pre_header
    _
  $region3: #{tpu_custom_call.1} parent=0 // loop_header
    %s9 = sphi 0, %s13
    %p10 = scmp.ge.s32.totalorder %s9, 4
    %s16 = sphi 0, %s28
    %s17 = sphi 0, %s24
    %s18 = sphi 0, %s16
    %s19 = sphi 0, %s17
    %s20 = sphi 0, %s18
    %s21 = sphi 0, %s19
    %s33 = sphi 0, %s35
    %s36 = sphi 0, %s33
    %s37 = sphi 0, %s36
    %s53 = sphi 0, %s37
    %s57 = sphi 0, %s57
    %s59 = sphi 0, %s57
    %s60 = sphi 0, %s59
    %s74 = sphi 0, %s60
    %s78 = sphi 0, %s78
    %s80 = sphi 0, %s78
    %s81 = sphi 0, %s80
    %s95 = sphi 0, %s81
    %s103 = sphi 0, %s105
    %s106 = sphi 0, %s103
    %s107 = sphi 0, %s106
    %s123 = sphi 0, %s107
  $region4: #{tpu_custom_call.1} parent=0 // loop_header_branch
    %12 = sbr.rel (%p10) target = $region8
  $region5: #{tpu_custom_call.1} parent=0 // loop_body
    %s14 = ssub.s32 %s9, 1
    %s15 = ssub.s32 %s9, 2
    %s22 = sadd.s32 1, %s17
    %p23 = scmp.ge.s32.totalorder %s22, 1
    %s24 = scalar_select %p23, 0, %s22
    %s25 = sadd.s32 1, %s16
    %s26 = scalar_select %p23, %s25, %s16
    %p27 = scmp.ge.s32.totalorder %s26, 2
    %s28 = scalar_select %p27, 0, %s26
    %s29 = ssub.s32 %s16, %s28
    %s30 = ssub.s32 %s17, %s24
    %s31 = sor.u32 %s29, %s30
    %p32 = scmp.eq.s32.totalorder %s31, 0
    %s34 = sadd.s32 %s33, 1
    %s35 = scalar_select %p32, %s33, %s34
    %p38 = pneg %p32
    %p39 = scmp.eq.s32.totalorder %s9, 1
    %p40 = por %p38, %p39
    %p41 = scmp.ne.s32.totalorder %s33, %s36
    %p42 = scmp.eq.s32.totalorder %s9, 0
    %p43 = por %p41, %p42
    %p44 = scmp.ne.s32.totalorder %s33, %s36
    %p45 = scmp.eq.s32.totalorder %s14, 1
    %p46 = por %p44, %p45
    %p47 = scmp.ne.s32.totalorder %s36, %s37
    %p48 = scmp.eq.s32.totalorder %s14, 0
    %p49 = por %p47, %p48
    %p50 = scmp.ne.s32.totalorder %s36, %s37
    %p51 = scmp.eq.s32.totalorder %s15, 1
    %p52 = por %p50, %p51
    %p54 = scmp.ne.s32.totalorder %s37, %s53
    %p55 = scmp.eq.s32.totalorder %s15, 0
    %p56 = por %p54, %p55
    %s58 = sadd.s32 %s57, 1
    %p61 = scmp.eq.s32.totalorder %s9, 1
    %p62 = scmp.ne.s32.totalorder %s57, %s59
    %p63 = scmp.eq.s32.totalorder %s9, 0
    %p64 = por %p62, %p63
    %p65 = scmp.ne.s32.totalorder %s57, %s59
    %p66 = scmp.eq.s32.totalorder %s14, 1
    %p67 = por %p65, %p66
    %p68 = scmp.ne.s32.totalorder %s59, %s60
    %p69 = scmp.eq.s32.totalorder %s14, 0
    %p70 = por %p68, %p69
    %p71 = scmp.ne.s32.totalorder %s59, %s60
    %p72 = scmp.eq.s32.totalorder %s15, 1
    %p73 = por %p71, %p72
    %p75 = scmp.ne.s32.totalorder %s60, %s74
    %p76 = scmp.eq.s32.totalorder %s15, 0
    %p77 = por %p75, %p76
    %s79 = sadd.s32 %s78, 1
    %p82 = scmp.eq.s32.totalorder %s9, 1
    %p83 = scmp.ne.s32.totalorder %s78, %s80
    %p84 = scmp.eq.s32.totalorder %s9, 0
    %p85 = por %p83, %p84
    %p86 = scmp.ne.s32.totalorder %s78, %s80
    %p87 = scmp.eq.s32.totalorder %s14, 1
    %p88 = por %p86, %p87
    %p89 = scmp.ne.s32.totalorder %s80, %s81
    %p90 = scmp.eq.s32.totalorder %s14, 0
    %p91 = por %p89, %p90
    %p92 = scmp.ne.s32.totalorder %s80, %s81
    %p93 = scmp.eq.s32.totalorder %s15, 1
    %p94 = por %p92, %p93
    %p96 = scmp.ne.s32.totalorder %s81, %s95
    %p97 = scmp.eq.s32.totalorder %s15, 0
    %p98 = por %p96, %p97
    %s99 = ssub.s32 %s16, %s28
    %s100 = ssub.s32 %s17, %s24
    %s101 = sor.u32 %s99, %s100
    %p102 = scmp.eq.s32.totalorder %s101, 0
    %s104 = sadd.s32 %s103, 1
    %s105 = scalar_select %p102, %s103, %s104
    %p108 = pneg %p102
    %p109 = scmp.eq.s32.totalorder %s9, 1
    %p110 = por %p108, %p109
    %p111 = scmp.ne.s32.totalorder %s103, %s106
    %p112 = scmp.eq.s32.totalorder %s9, 0
    %p113 = por %p111, %p112
    %p114 = scmp.ne.s32.totalorder %s103, %s106
    %p115 = scmp.eq.s32.totalorder %s14, 1
    %p116 = por %p114, %p115
    %p117 = scmp.ne.s32.totalorder %s106, %s107
    %p118 = scmp.eq.s32.totalorder %s14, 0
    %p119 = por %p117, %p118
    %p120 = scmp.ne.s32.totalorder %s106, %s107
    %p121 = scmp.eq.s32.totalorder %s15, 1
    %p122 = por %p120, %p121
    %p124 = scmp.ne.s32.totalorder %s107, %s123
    %p125 = scmp.eq.s32.totalorder %s15, 0
    %p126 = por %p124, %p125
    %p127 = scmp.le.s32.totalorder 1, %s9
    %p128 = scmp.lt.s32.totalorder %s9, 3
    %p129 = pnand %p127, %p128
    %p130 = pneg %p129
    // Predicated region
    $region9: #{tpu_custom_call.1} parent=5 // pred_check
      _
    $region10: #{tpu_custom_call.1} parent=5 // pred_check_branch
      %132 = sbr.rel (%p129) target = $region12
    $region11: #{tpu_custom_call.1} parent=5 // pred_region
      %s133 = ssub.s32 %s9, 1
      // Predicated region
      $region13: #{tpu_custom_call.1} parent=11 // pred_check
        %p134 = pneg %p70
      $region14: #{tpu_custom_call.1} parent=11 // pred_check_branch
        %136 = sbr.rel (%p134) target = $region16
      $region15: #{tpu_custom_call.1} parent=11 // pred_region
        _
      $region16: #{tpu_custom_call.1} parent=11 // pred_fallthru
        _
      // Predicated region
      $region17: #{tpu_custom_call.1} parent=11 // pred_check
        %p137 = pneg %p91
      $region18: #{tpu_custom_call.1} parent=11 // pred_check_branch
        %139 = sbr.rel (%p137) target = $region20
      $region19: #{tpu_custom_call.1} parent=11 // pred_region
        _
      $region20: #{tpu_custom_call.1} parent=11 // pred_fallthru
        _
    $region12: #{tpu_custom_call.1} parent=5 // pred_fallthru
      _
    %p140 = scmp.lt.s32.totalorder %s9, 2
    // Predicated region
    $region21: #{tpu_custom_call.1} parent=5 // pred_check
      %p141 = pneg %p140
    $region22: #{tpu_custom_call.1} parent=5 // pred_check_branch
      %143 = sbr.rel (%p141) target = $region24
    $region23: #{tpu_custom_call.1} parent=5 // pred_region
      // Predicated region
      $region25: #{tpu_custom_call.1} parent=23 // pred_check
        %p144 = pneg %p43
      $region26: #{tpu_custom_call.1} parent=23 // pred_check_branch
        %146 = sbr.rel (%p144) target = $region28
      $region27: #{tpu_custom_call.1} parent=23 // pred_region
        %p147 = scmp.lt.s32.totalorder %s16, 1
        %s148 = scalar_select %p147, %s16, 1
        %p149 = scmp.lt.s32.totalorder %s17, 0
        %s150 = scalar_select %p149, %s17, 0
        %s151 = sadd.s32 %s150, %s148
        %s152 = smul.addr %s151, 2
        %s153 = scalar_lea.vmem %s0, %s152
      $region28: #{tpu_custom_call.1} parent=23 // pred_fallthru
        _
    $region24: #{tpu_custom_call.1} parent=5 // pred_fallthru
      _
    %p154 = scmp.le.s32.totalorder 1, %s9
    %p155 = scmp.lt.s32.totalorder %s9, 3
    %p156 = pnand %p154, %p155
    %p157 = pneg %p156
    // Predicated region
    $region29: #{tpu_custom_call.1} parent=5 // pred_check
      _
    $region30: #{tpu_custom_call.1} parent=5 // pred_check_branch
      %159 = sbr.rel (%p156) target = $region32
    $region31: #{tpu_custom_call.1} parent=5 // pred_region
      %s160 = ssub.s32 %s9, 1
      %p161 = scmp.lt.s32.totalorder %s18, 1
      %s162 = scalar_select %p161, %s18, 1
      %p163 = scmp.lt.s32.totalorder %s19, 0
      %s164 = scalar_select %p163, %s19, 0
      %s165 = sadd.s32 %s164, %s162
      %s166 = smul.addr %s165, 2
      %s167 = scalar_lea.vmem %s0, %s166
      %p168 = pneg %p49
      %p169 = pneg %p46
      %p170 = pneg %p70
      %p171 = pneg %p67
      %p172 = pneg %p91
      %p173 = pneg %p88
      %p174 = pneg %p119
      %p175 = pneg %p116
      %p176 = scmp.lt.s32.totalorder %s18, 1
      %s177 = scalar_select %p176, %s18, 1
      %p178 = scmp.lt.s32.totalorder %s19, 0
      %s179 = scalar_select %p178, %s19, 0
      %s180 = smul.addr %s177, 3
      %s181 = sadd.s32 %s179, %s180
      %s182 = smul.addr %s181, 4
      %s183 = scalar_lea.vmem %s3, %s182
      %p184 = scmp.lt.s32.totalorder %s18, 1
      %s185 = scalar_select %p184, %s18, 1
      %p186 = scmp.lt.s32.totalorder %s19, 0
      %s187 = scalar_select %p186, %s19, 0
      %s188 = sadd.s32 %s187, %s185
      %s189 = smul.addr %s188, 2
      %s190 = scalar_lea.vmem %s0, %s189
      %p191 = scmp.lt.s32.totalorder %s18, 1
      %s192 = scalar_select %p191, %s18, 1
      %p193 = scmp.lt.s32.totalorder %s19, 0
      %s194 = scalar_select %p193, %s19, 0
      %s195 = smul.addr %s192, 3
      %s196 = sadd.s32 %s194, %s195
      %s197 = smul.addr %s196, 4
      %s198 = scalar_lea.vmem %s3, %s197
      %v199 = vld [vmem:[%s190] sm:$0x3]
      %v200 = vunpack.c.l.bf16 %v199
      %v201 = vld [vmem:[%s1] sm:$0xf]
      %v202 = vld [vmem:[%s1 + $0x4] sm:$0xf]
      %v203 = vld [vmem:[%s1 + $0x8] sm:$0xf]
      %v204 = vunpack.c.l.bf16 %v201
      %v205 = vunpack.c.l.bf16 %v202
      %v206 = vunpack.c.l.bf16 %v203
      %v207 = vld [vmem:[%s2] sm:$0xff]
      %v208 = vld [vmem:[%s2 + $0x8] sm:$0xff]
      %v209 = vld [vmem:[%s2 + $0x10] sm:$0xff]
      %211 = vset.pattern.permute.xlu0 0
      %212 = vperm.xlu0 %211, %v204
      %v213 = vpop.permute.xlu0 %212
      %216 = vset.pattern.permute.xlu0 0
      %217 = vperm.xlu0 %216, %v205
      %v218 = vpop.permute.xlu0 %217
      %221 = vset.pattern.permute.xlu0 0
      %222 = vperm.xlu0 %221, %v206
      %v223 = vpop.permute.xlu0 %222
      %v225 = vlaneseq
      %v226 = vshrl.u32 %v225, 7
      %v227 = vsub.s32 0, %v226
      %v228 = vrot.slane %v200, %v227
      %v229 = vmul.f32 %v213, %v228
      %v230 = vmul.f32 %v218, %v228
      %v231 = vmul.f32 %v223, %v228
      %233 = vset.pattern.permute.xlu0 0
      %234 = vperm.xlu0 %233, %v207
      %v235 = vpop.permute.xlu0 %234
      %238 = vset.pattern.permute.xlu0 0
      %239 = vperm.xlu0 %238, %v208
      %v240 = vpop.permute.xlu0 %239
      %243 = vset.pattern.permute.xlu0 0
      %244 = vperm.xlu0 %243, %v209
      %v245 = vpop.permute.xlu0 %244
      %v247 = vadd.f32 %v235, %v229
      %v248 = vadd.f32 %v240, %v230
      %v249 = vadd.f32 %v245, %v231
      %250 = vset.pattern.permute.xlu0 1
      %251 = vperm.xlu0 %250, %v204
      %v252 = vpop.permute.xlu0 %251
      %254 = vset.pattern.permute.xlu0 1
      %255 = vperm.xlu0 %254, %v205
      %v256 = vpop.permute.xlu0 %255
      %258 = vset.pattern.permute.xlu0 1
      %259 = vperm.xlu0 %258, %v206
      %v260 = vpop.permute.xlu0 %259
      %v262 = vlaneseq
      %v263 = vshrl.u32 %v262, 7
      %v264 = vsub.s32 1, %v263
      %v265 = vrot.slane %v200, %v264
      %v266 = vmul.f32 %v252, %v265
      %v267 = vmul.f32 %v256, %v265
      %v268 = vmul.f32 %v260, %v265
      %v269 = vadd.f32 %v247, %v266
      %v270 = vadd.f32 %v248, %v267
      %v271 = vadd.f32 %v249, %v268
      %272 = vset.pattern.permute.xlu0 2
      %273 = vperm.xlu0 %272, %v204
      %v274 = vpop.permute.xlu0 %273
      %276 = vset.pattern.permute.xlu0 2
      %277 = vperm.xlu0 %276, %v205
      %v278 = vpop.permute.xlu0 %277
      %280 = vset.pattern.permute.xlu0 2
      %281 = vperm.xlu0 %280, %v206
      %v282 = vpop.permute.xlu0 %281
      %v284 = vlaneseq
      %v285 = vshrl.u32 %v284, 7
      %v286 = vsub.s32 2, %v285
      %v287 = vrot.slane %v200, %v286
      %v288 = vmul.f32 %v274, %v287
      %v289 = vmul.f32 %v278, %v287
      %v290 = vmul.f32 %v282, %v287
      %v291 = vadd.f32 %v269, %v288
      %v292 = vadd.f32 %v270, %v289
      %v293 = vadd.f32 %v271, %v290
      %v294 = vmax.f32 %v291, 0.0
      %v295 = vmax.f32 %v292, 0.0
      %v296 = vmax.f32 %v293, 0.0
      %v297 = vpack.c.bf16 %v295, %v294
      %v298 = vpack.c.bf16 %v296, %v296
      %v301 = vunpack.c.l.b16 %v297
      %v302 = vunpack.c.h.b16 %v297
      %v303 = vunpack.c.l.b16 %v298
      %v304 = vpack.c.b16 %v301, %v301
      %v305 = vpack.c.b16 %v302, %v302
      %v306 = vpack.c.b16 %v303, %v303
      %vm310 = vcmask 125952
      %311 = vst.msk [vmem:[%s198] sm:$0xf] %vm310, %v304
      %312 = vst.msk [vmem:[%s198 + $0x4] sm:$0xf] %vm310, %v305
      %313 = vst.msk [vmem:[%s198 + $0x8] sm:$0xf] %vm310, %v306
      %p314 = scmp.lt.s32.totalorder %s18, 1
      %s315 = scalar_select %p314, %s18, 1
      %p316 = scmp.lt.s32.totalorder %s19, 0
      %s317 = scalar_select %p316, %s19, 0
      %s318 = smul.addr %s315, 3
      %s319 = sadd.s32 %s317, %s318
      %s320 = smul.addr %s319, 4
      %s321 = scalar_lea.vmem %s3, %s320
      // Predicated region
      $region33: #{tpu_custom_call.1} parent=31 // pred_check
        %p322 = pneg %p116
      $region34: #{tpu_custom_call.1} parent=31 // pred_check_branch
        %324 = sbr.rel (%p322) target = $region36
      $region35: #{tpu_custom_call.1} parent=31 // pred_region
        _
      $region36: #{tpu_custom_call.1} parent=31 // pred_fallthru
        _
    $region32: #{tpu_custom_call.1} parent=5 // pred_fallthru
      _
    %p325 = scmp.le.s32.totalorder 2, %s9
    // Predicated region
    $region37: #{tpu_custom_call.1} parent=5 // pred_check
      %p326 = pneg %p325
    $region38: #{tpu_custom_call.1} parent=5 // pred_check_branch
      %328 = sbr.rel (%p326) target = $region40
    $region39: #{tpu_custom_call.1} parent=5 // pred_region
      %s329 = ssub.s32 %s9, 2
      // Predicated region
      $region41: #{tpu_custom_call.1} parent=39 // pred_check
        %p330 = pneg %p122
      $region42: #{tpu_custom_call.1} parent=39 // pred_check_branch
        %332 = sbr.rel (%p330) target = $region44
      $region43: #{tpu_custom_call.1} parent=39 // pred_region
        %p333 = scmp.lt.s32.totalorder %s20, 1
        %s334 = scalar_select %p333, %s20, 1
        %p335 = scmp.lt.s32.totalorder %s21, 0
        %s336 = scalar_select %p335, %s21, 0
        %s337 = smul.addr %s334, 3
        %s338 = sadd.s32 %s336, %s337
        %s339 = smul.addr %s338, 4
        %s340 = scalar_lea.vmem %s3, %s339
      $region44: #{tpu_custom_call.1} parent=39 // pred_fallthru
        _
    $region40: #{tpu_custom_call.1} parent=5 // pred_fallthru
      _
  $region6: #{tpu_custom_call.1} parent=0 // loop_footer
    %s13 = sadd.s32 1, %s9
  $region7: #{tpu_custom_call.1} parent=0 // loop_footer_branch
    %8 = sbr.rel target = $region3
  $region8: #{tpu_custom_call.1} parent=0 // loop_exit
    _

</llo_original>
